<compile_context>
chip_gen: v6e
topology: v6e:2x2x1
jax: 0.10.0
libtpu: 0.0.40
codegen_flags: <defaults>
</compile_context>

<pallas_src>
import inspect

import jax
import jax.numpy as jnp
from jax.experimental import pallas as pl
from jax.experimental.pallas import tpu as pltpu

EPS = 1e-6
_STREAM_BUFFERS = 3  # pipelining depth requested for the streamed x / out tiles

try:
    _HAS_PIPELINE_MODE = "pipeline_mode" in inspect.signature(pl.BlockSpec).parameters
except Exception:  # pragma: no cover - signature introspection failed
    _HAS_PIPELINE_MODE = False


# --------------------------------------------------------------------------- #
# Kernel
# --------------------------------------------------------------------------- #
def sublayer_connection_kernel(x_ref, w_ref, bias_ref, o_ref):
    # x_ref: (TR, H) row tile; w_ref: (H, H) bf16 (LayerNorm gain pre-folded);
    # bias_ref: (1, H) f32 (b_2 @ W^T + bias pre-folded).
    x = x_ref[...].astype(jnp.float32)
    h = x.shape[-1]

    # --- LayerNorm stats, one pass over x (two independent lane reductions) ---
    sum_x = jnp.sum(x, axis=-1, keepdims=True)
    sum_x2 = jnp.sum(x * x, axis=-1, keepdims=True)
    mean = sum_x * (1.0 / h)
    # torch-style *unbiased* variance (N-1); clamp tiny negative cancellation.
    var_unbiased = jnp.maximum((sum_x2 - sum_x * mean) * (1.0 / (h - 1)), 0.0)
    std = jnp.sqrt(var_unbiased)
    inv = pl.reciprocal(std + EPS, approx=False)  # EUP slot, exact
    normalized = (x - mean) * inv                  # a_2/b_2 folded into w/bias

    # --- sublayer: Linear(size, size), bf16 MXU inputs, f32 accumulation ---
    z = jnp.dot(normalized.astype(jnp.bfloat16), w_ref[...],
                preferred_element_type=jnp.float32) + bias_ref[...]

    # --- dropout: inference mode -> identity ---
    # TODO(synk): training-mode dropout would use pltpu.prng_seed/prng_random_bits.

    # --- residual ---
    o_ref[...] = (x + z).astype(o_ref.dtype)


# --------------------------------------------------------------------------- #
# Host-side helpers
# --------------------------------------------------------------------------- #
def fold_params(w, bias, a2, b2):
    """One-time parameter prep (hoist out of the per-call path).

    `w` is the already-transposed Linear weight, i.e. y @ w == y @ W_pt.T.
    Exact algebra:  (a2*n + b2) @ w + bias == n @ (a2[:,None]*w) + (b2 @ w + bias).
    """
    w_folded = (a2[:, None] * w).astype(jnp.bfloat16)
    bias_folded = (b2 @ w + bias).reshape(1, -1).astype(jnp.float32)
    return w_folded, bias_folded


def _vmem_limit_bytes():
    """Generation-aware VMEM limit: capacity minus ~16 MiB headroom."""
    try:
        cap = int(pltpu.get_tpu_info().vmem_capacity_bytes)
    except Exception:
        cap = 64 * 1024 * 1024  # assume the smallest (v7x per-TC) if query fails
    return max(32 * 1024 * 1024, min(cap - 16 * 1024 * 1024, 100 * 1024 * 1024))


def _pick_row_tile(rows, H, vmem_budget_bytes):
    """Largest row tile fitting the budget; tiny inputs get one exact block."""
    rows8 = max(8, pl.cdiv(rows, 8) * 8)
    # Resident constants: bf16 weight (single-buffered target) + folded bias.
    weight_bytes = H * H * 2
    const_bytes = H * 4
    # TODO(synk): for very large H (weight ~ VMEM) add a column/K grid axis so
    # row_tile stays large on v7x's 64 MiB VMEM.
    avail = max(vmem_budget_bytes - weight_bytes - const_bytes, 1 << 20)
    # Per-row f32 bytes: streamed x + out (each _STREAM_BUFFERS deep) plus
    # ~5 full-width in-kernel temporaries (x f32, normalized, bf16 LHS, z, out).
    per_row = (2 * _STREAM_BUFFERS + 5) * H * 4
    rt = int(avail // per_row)
    rt = max(8, min(rt, 1024))
    if rt >= rows8:
        return int(rows8)          # one exact block, no partial-block waste
    if rt >= 256:
        rt -= rt % 256             # full MXU height (multiple of 256)
    else:
        rt -= rt % 8
    return int(rt)


def _make_specs(row_tile, H, use_pipeline_modes):
    stream_kw, const_kw = {}, {}
    if use_pipeline_modes:
        # Deeper pipelining on the streamed operands; grid-invariant blocks
        # single-buffered (no benefit from double-buffering; reclaim VMEM).
        stream_kw = dict(pipeline_mode=pl.Buffered(_STREAM_BUFFERS))
        const_kw = dict(pipeline_mode=pl.Buffered(1))
    in_specs = [
        pl.BlockSpec((row_tile, H), lambda i: (i, 0), **stream_kw),    # x tile
        pl.BlockSpec((H, H), lambda i: (0, 0), **const_kw),            # folded weight (bf16)
        pl.BlockSpec((1, H), lambda i: (0, 0), **const_kw),            # folded bias
    ]
    out_spec = pl.BlockSpec((row_tile, H), lambda i: (i, 0), **stream_kw)
    return in_specs, out_spec


def _call(x2, w_folded, bias_folded, row_tile, use_pipeline_modes, out_dtype, vmem_limit):
    rows, H = x2.shape
    in_specs, out_spec = _make_specs(row_tile, H, use_pipeline_modes)
    return pl.pallas_call(
        sublayer_connection_kernel,
        out_shape=jax.ShapeDtypeStruct((rows, H), out_dtype),
        grid_spec=pltpu.PrefetchScalarGridSpec(
            num_scalar_prefetch=0,
            grid=(pl.cdiv(rows, row_tile),),     # partial last block masked by Pallas
            in_specs=in_specs,
            out_specs=out_spec,
        ),
        compiler_params=pltpu.CompilerParams(
            dimension_semantics=("parallel",),   # row loop shards across TCs on v7x
            vmem_limit_bytes=vmem_limit,
        ),
    )(x2, w_folded, bias_folded)


def sublayer_connection(x, w_folded, bias_folded, *, row_tile=None, out_dtype=None):
    """x: (B, S, H) f32 or bf16.  w_folded/bias_folded: from fold_params()."""
    B, S, H = x.shape
    rows = B * S
    vmem_limit = _vmem_limit_bytes()
    if row_tile is None:
        row_tile = _pick_row_tile(rows, H, int(0.8 * vmem_limit))
    out_dtype = x.dtype if out_dtype is None else out_dtype

    x2 = x.reshape(rows, H)   # no host-side pad; no trailing slice

    if _HAS_PIPELINE_MODE:
        try:
            return _call(x2, w_folded, bias_folded, row_tile, True,
                         out_dtype, vmem_limit).reshape(B, S, H)
        except Exception:
            # Fallback only disables the Buffered(n) pipelining *hints*
            # (semantics identical); failures of the plain path propagate.
            pass
    return _call(x2, w_folded, bias_folded, row_tile, False,
                 out_dtype, vmem_limit).reshape(B, S, H)


# --------------------------------------------------------------------------- #
# Pure-JAX reference (mirrors the PyTorch forward)
# --------------------------------------------------------------------------- #
def reference(x, w, bias, a2, b2):
    mean = jnp.mean(x, axis=-1, keepdims=True)
    centered = x - mean
    h = x.shape[-1]
    std = jnp.sqrt(jnp.sum(centered**2, axis=-1, keepdims=True) / (h - 1))
    y = a2 * centered / (std + EPS) + b2
    z = y @ w + bias
    return x + z


if __name__ == "__main__":
    key = jax.random.PRNGKey(0)
    B, S, H = 2, 8, 128  # H=128 -> lane-dense stores and full MXU width on v5e

    kx, kw, kb = jax.random.split(key, 3)
    x = jax.random.normal(kx, (B, S, H), dtype=jnp.float32)

    # Deterministic synthetic parameters (not a checkpoint load).
    # PyTorch Linear(size, size): weight (out, in), bias (out,).
    w_pt = jax.random.normal(kw, (H, H), dtype=jnp.float32) * 0.02
    bias = jax.random.normal(kb, (H,), dtype=jnp.float32) * 0.02
    # LayerNorm params as in __init__: a_2 = ones, b_2 = zeros.
    a2 = jnp.ones((H,), dtype=jnp.float32)
    b2 = jnp.zeros((H,), dtype=jnp.float32)

    # One-time parameter prep, hoisted out of the per-call path:
    # transpose the PyTorch weight, fold the LayerNorm affine, cast to bf16.
    w_folded, bias_folded = fold_params(w_pt.T, bias, a2, b2)
    w_folded, bias_folded = jax.block_until_ready((w_folded, bias_folded))

    out = sublayer_connection(x, w_folded, bias_folded)
    out = jax.block_until_ready(out)

    ref = reference(x, w_pt.T, bias.reshape(1, 1, H), a2, b2)
    assert out.shape == (B, S, H)
    # Tolerance covers bf16 MXU inputs (f32 accumulate); LayerNorm math is f32.
    assert jnp.allclose(out, ref, atol=3e-2, rtol=3e-2), "mismatch vs reference"

    print("KERNEL_OK")
</pallas_src>

<mosaic_0001>
module attributes {stable_mosaic.version = 11 : i64} {
  func.func @sublayer_connection_kernel(%arg0: i32, %arg1: memref<16x128xf32, #tpu.memory_space<vmem>>, %arg2: memref<128x128xbf16, #tpu.memory_space<vmem>>, %arg3: memref<1x128xf32, #tpu.memory_space<vmem>>, %arg4: memref<16x128xf32, #tpu.memory_space<vmem>>) attributes {dimension_semantics = [#tpu.dimension_semantics<parallel>], iteration_bounds = array<i64: 1>, scalar_prefetch = 0 : i64, scratch_operands = 0 : i64, tpu.core_type = #tpu.core_type<tc>, window_params = [{transform_indices = @transform_0, window_bounds = array<i64: 16, 128>}, {pipeline_mode = #tpu.pipeline_mode<synchronous>, transform_indices = @transform_1, window_bounds = array<i64: 128, 128>}, {pipeline_mode = #tpu.pipeline_mode<synchronous>, transform_indices = @transform_2, window_bounds = array<i64: 1, 128>}, {transform_indices = @transform_3, window_bounds = array<i64: 16, 128>}]} {
    %c0 = arith.constant 0 : index
    %c0_0 = arith.constant 0 : index
    %0 = vector.load %arg1[%c0, %c0_0] : memref<16x128xf32, #tpu.memory_space<vmem>>, vector<16x128xf32>
    %cst = arith.constant dense<0.000000e+00> : vector<16xf32>
    %1 = vector.multi_reduction <add>, %0, %cst [1] : vector<16x128xf32> to vector<16xf32>
    %2 = vector.shape_cast %1 : vector<16xf32> to vector<16x1xf32>
    %3 = arith.mulf %0, %0 : vector<16x128xf32>
    %cst_1 = arith.constant dense<0.000000e+00> : vector<16xf32>
    %4 = vector.multi_reduction <add>, %3, %cst_1 [1] : vector<16x128xf32> to vector<16xf32>
    %5 = vector.shape_cast %4 : vector<16xf32> to vector<16x1xf32>
    %cst_2 = arith.constant 7.812500e-03 : f32
    %6 = vector.broadcast %cst_2 : f32 to vector<16x1xf32>
    %7 = arith.mulf %2, %6 : vector<16x1xf32>
    %8 = arith.mulf %2, %7 : vector<16x1xf32>
    %9 = arith.subf %5, %8 : vector<16x1xf32>
    %cst_3 = arith.constant 0.00787401571 : f32
    %10 = vector.broadcast %cst_3 : f32 to vector<16x1xf32>
    %11 = arith.mulf %9, %10 : vector<16x1xf32>
    %cst_4 = arith.constant 0.000000e+00 : f32
    %12 = vector.broadcast %cst_4 : f32 to vector<16x1xf32>
    %13 = arith.maximumf %11, %12 : vector<16x1xf32>
    %14 = math.sqrt %13 : vector<16x1xf32>
    %cst_5 = arith.constant 9.99999997E-7 : f32
    %15 = vector.broadcast %cst_5 : f32 to vector<16x1xf32>
    %16 = arith.addf %14, %15 : vector<16x1xf32>
    %17 = tpu.reciprocal %16 : vector<16x1xf32> -> vector<16x1xf32>
    %18 = vector.broadcast %7 : vector<16x1xf32> to vector<16x128xf32>
    %19 = arith.subf %0, %18 : vector<16x128xf32>
    %20 = vector.broadcast %17 : vector<16x1xf32> to vector<16x128xf32>
    %21 = arith.mulf %19, %20 : vector<16x128xf32>
    %22 = arith.truncf %21 : vector<16x128xf32> to vector<16x128xbf16>
    %c0_6 = arith.constant 0 : index
    %c0_7 = arith.constant 0 : index
    %23 = vector.load %arg2[%c0_6, %c0_7] : memref<128x128xbf16, #tpu.memory_space<vmem>>, vector<128x128xbf16>
    %cst_8 = arith.constant dense<0.000000e+00> : vector<16x128xf32>
    %24 = tpu.matmul %22, %23, %cst_8 {dimension_numbers = #tpu.dot_dimension_numbers<[1], [0], [0], [1], [0, 0, 1, 1], [], []>} : vector<16x128xbf16>, vector<128x128xbf16>, vector<16x128xf32> -> vector<16x128xf32>
    %c0_9 = arith.constant 0 : index
    %c0_10 = arith.constant 0 : index
    %25 = vector.load %arg3[%c0_9, %c0_10] : memref<1x128xf32, #tpu.memory_space<vmem>>, vector<1x128xf32>
    %26 = vector.broadcast %25 : vector<1x128xf32> to vector<16x128xf32>
    %27 = arith.addf %24, %26 : vector<16x128xf32>
    %28 = arith.addf %0, %27 : vector<16x128xf32>
    %c0_11 = arith.constant 0 : index
    %c0_12 = arith.constant 0 : index
    %29 = vector.load %arg4[%c0_11, %c0_12] : memref<16x128xf32, #tpu.memory_space<vmem>>, vector<16x128xf32>
    tpu.vector_store %arg4[%c0_11, %c0_12], %28 {strides = array<i32>} : memref<16x128xf32, #tpu.memory_space<vmem>>, vector<16x128xf32>,
    return
  }
  func.func @transform_0(%arg0: i32) -> (i32, i32) {
    %c0_i32 = arith.constant 0 : i32
    %c0_i32_0 = arith.constant 0 : i32
    return %arg0, %c0_i32 : i32, i32
  }
  func.func @transform_1(%arg0: i32) -> (i32, i32) {
    %c0_i32 = arith.constant 0 : i32
    %c0_i32_0 = arith.constant 0 : i32
    %c0_i32_1 = arith.constant 0 : i32
    return %c0_i32, %c0_i32_0 : i32, i32
  }
  func.func @transform_2(%arg0: i32) -> (i32, i32) {
    %c0_i32 = arith.constant 0 : i32
    %c0_i32_0 = arith.constant 0 : i32
    %c0_i32_1 = arith.constant 0 : i32
    return %c0_i32, %c0_i32_0 : i32, i32
  }
  func.func @transform_3(%arg0: i32) -> (i32, i32) {
    %c0_i32 = arith.constant 0 : i32
    %c0_i32_0 = arith.constant 0 : i32
    return %arg0, %c0_i32 : i32, i32
  }
}

</mosaic_0001>

<llo_original>
// kernel: tpu_custom_call.1
$region0: #{tpu_custom_call.1}
  #allocation0 [shape = 'u32[]', space=smem, size = 0x4, offset = 0x4, fixed_abs, tag = 'smem constant byte address 0x4 - core index']
  #allocation1 [shape = 'u32[144,128]{1,0:T(1,128)}', space=vmem, size = 0x12000, scoped, tag = 'internal scratch']
  %s0 = inlined_call_operand.hbm [shape: f32[16,128], index: 0, kind: input, shape index: {}]
  %s1 = inlined_call_operand.hbm [shape: bf16[128,128], index: 1, kind: input, shape index: {}]
  %s2 = inlined_call_operand.vmem [shape: f32[1,128], index: 2, kind: input, shape index: {}]
  %s3 = inlined_call_operand.hbm [shape: f32[16,128], index: 3, kind: output, shape index: {}]
  %s4 = sld [smem:[#allocation0]]
  $region30: #{tpu_custom_call.1} parent=0
    _
  %s6 = ssub.s32 1, %s4
  %s7 = scalar_select 0, %s6, %s4
  $region1: #{tpu_custom_call.1} parent=0
    #allocation2 [shape = 'u8[8192]{0}', space=vmem, size = 0x2000, scoped, tag = 'input window, operand 0, single buffered']
    #allocation3 [shape = 's32[1]{0}', space=sflag, size = 0x4, scoped, tag = 'scoped memory for tpu_custom_call.1']
    #allocation4 [shape = 's32[1]{0}', space=sflag, size = 0x4, scoped, tag = 'scoped memory for tpu_custom_call.1']
    #allocation5 [shape = 'u8[32768]{0}', space=vmem, size = 0x8000, scoped, tag = 'input window, operand 1, single buffered']
    #allocation6 [shape = 's32[1]{0}', space=sflag, size = 0x4, scoped, tag = 'scoped memory for tpu_custom_call.1']
    #allocation7 [shape = 'u8[8192]{0}', space=vmem, size = 0x2000, scoped, tag = 'output window, operand 0, single buffered']
    %8 = vsyncpa [#allocation3], 0
    %9 = vsyncpa [#allocation6], 0
    %10 = vsyncpa [#allocation4], 0
    // Predicated region
    $region2: #{tpu_custom_call.1} parent=1 // pred_check
      _
    $region3: #{tpu_custom_call.1} parent=1 // pred_check_branch
      %12 = sbr.rel (0) target = $region5
    $region4: #{tpu_custom_call.1} parent=1 // pred_region
      %s14 = ssub.s32 256, 256
      %15 = vsyncadd [#allocation3], %s14
      %s16 = sshll.u32 [#allocation2], 4
      %s17 = int_to_ptr.vmem [resolvable:$true] %s16
      %22 = dma.hbm_to_vmem [thread:$0]  %s0, 256, %s17, [#allocation3], 128, 128, 8
    $region5: #{tpu_custom_call.1} parent=1 // pred_fallthru
      _
    // Predicated region
    $region6: #{tpu_custom_call.1} parent=1 // pred_check
      _
    $region7: #{tpu_custom_call.1} parent=1 // pred_check_branch
      %24 = sbr.rel (0) target = $region9
    $region8: #{tpu_custom_call.1} parent=1 // pred_region
      %s26 = ssub.s32 1024, 1024
      %27 = vsyncadd [#allocation6], %s26
      %s28 = sshll.u32 [#allocation5], 4
      %s29 = int_to_ptr.vmem [resolvable:$true] %s28
      %34 = dma.hbm_to_vmem [thread:$0]  %s1, 1024, %s29, [#allocation6], 64, 64, 4
    $region9: #{tpu_custom_call.1} parent=1 // pred_fallthru
      _
    // Predicated region
    $region10: #{tpu_custom_call.1} parent=1 // pred_check
      _
    $region11: #{tpu_custom_call.1} parent=1 // pred_check_branch
      %36 = sbr.rel (0) target = $region13
    $region12: #{tpu_custom_call.1} parent=1 // pred_region
      _
    $region13: #{tpu_custom_call.1} parent=1 // pred_fallthru
      _
    // Predicated region
    $region14: #{tpu_custom_call.1} parent=1 // pred_check
      _
    $region15: #{tpu_custom_call.1} parent=1 // pred_check_branch
      %38 = sbr.rel (0) target = $region17
    $region16: #{tpu_custom_call.1} parent=1 // pred_region
      %39 = dma.done [#allocation3], 256
    $region17: #{tpu_custom_call.1} parent=1 // pred_fallthru
      _
    // Predicated region
    $region18: #{tpu_custom_call.1} parent=1 // pred_check
      _
    $region19: #{tpu_custom_call.1} parent=1 // pred_check_branch
      %41 = sbr.rel (0) target = $region21
    $region20: #{tpu_custom_call.1} parent=1 // pred_region
      %42 = dma.done [#allocation6], 1024
    $region21: #{tpu_custom_call.1} parent=1 // pred_fallthru
      _
    %v44 = vld [vmem:[#allocation2] sm:$0xff]
    %v45 = vld [vmem:[#allocation2 + $0x8] sm:$0xff]
    %46 = vadd.xlane.f32.xlu0 %v44
    %v47 = vpop.xlane.xlu0 %46
    %48 = vadd.xlane.f32.xlu0 %v45
    %v49 = vpop.xlane.xlu0 %48
    %v50 = vmul.f32 %v44, %v44
    %v51 = vmul.f32 %v45, %v45
    %52 = vadd.xlane.f32.xlu0 %v50
    %v53 = vpop.xlane.xlu0 %52
    %54 = vadd.xlane.f32.xlu0 %v51
    %v55 = vpop.xlane.xlu0 %54
    %v56 = vmul.f32 %v47, 0.0078125
    %v57 = vmul.f32 %v49, 0.0078125
    %v58 = vmul.f32 %v47, %v56
    %v59 = vmul.f32 %v49, %v57
    %v60 = vsub.f32 %v53, %v58
    %v61 = vsub.f32 %v55, %v59
    %v62 = vmul.f32 %v60, 0.007874016
    %v63 = vmul.f32 %v61, 0.007874016
    %v64 = vmax.f32 %v62, 0.0
    %v65 = vmax.f32 %v63, 0.0
    %v66 = vrsqrt.pop %v64
    %v67 = vmul.f32 %v64, %v66
    %vm68 = vcmp.eq.f32.partialorder %v64, inf
    %v69 = vsel %vm68, %v64, %v67
    %vm70 = vcmp.eq.f32.partialorder %v64, 0.0
    %v71 = vand.u32 %v64, 2147483648
    %v72 = vsel %vm70, %v71, %v69
    %v73 = vrsqrt.pop %v65
    %v74 = vmul.f32 %v65, %v73
    %vm75 = vcmp.eq.f32.partialorder %v65, inf
    %v76 = vsel %vm75, %v65, %v74
    %vm77 = vcmp.eq.f32.partialorder %v65, 0.0
    %v78 = vand.u32 %v65, 2147483648
    %v79 = vsel %vm77, %v78, %v76
    %v80 = vadd.f32 %v72, 1e-06
    %v81 = vadd.f32 %v79, 1e-06
    %v82 = vrcp.pop %v80
    %v83 = vrcp.pop %v81
    %v84 = vsub.f32 %v44, %v56
    %v85 = vsub.f32 %v45, %v57
    %v86 = vmul.f32 %v84, %v82
    %v87 = vmul.f32 %v85, %v83
    %v88 = vpack.c.bf16 %v87, %v86
    %v89 = vld [vmem:[#allocation5] sm:$0xf]
    %v90 = vld [vmem:[#allocation5 + $0x4] sm:$0xf]
    %v91 = vld [vmem:[#allocation5 + $0x8] sm:$0xf]
    %v92 = vld [vmem:[#allocation5 + $0xc] sm:$0xf]
    %v93 = vld [vmem:[#allocation5 + $0x10] sm:$0xf]
    %v94 = vld [vmem:[#allocation5 + $0x14] sm:$0xf]
    %v95 = vld [vmem:[#allocation5 + $0x18] sm:$0xf]
    %v96 = vld [vmem:[#allocation5 + $0x1c] sm:$0xf]
    %v97 = vld [vmem:[#allocation5 + $0x20] sm:$0xf]
    %v98 = vld [vmem:[#allocation5 + $0x24] sm:$0xf]
    %v99 = vld [vmem:[#allocation5 + $0x28] sm:$0xf]
    %v100 = vld [vmem:[#allocation5 + $0x2c] sm:$0xf]
    %v101 = vld [vmem:[#allocation5 + $0x30] sm:$0xf]
    %v102 = vld [vmem:[#allocation5 + $0x34] sm:$0xf]
    %v103 = vld [vmem:[#allocation5 + $0x38] sm:$0xf]
    %v104 = vld [vmem:[#allocation5 + $0x3c] sm:$0xf]
    %v105 = vld [vmem:[%s2] sm:$0x1]
    %v107 = vlaneseq
    %v108 = vshrl.u32 %v107, 7
    %v109 = vsub.s32 0, %v108
    %v110 = vrot.slane %v105, %v109
    %v128 = vunpack.c.l.b16 %v89
    %v129 = vunpack.c.l.b16 %v90
    %v130 = vunpack.c.l.b16 %v91
    %v131 = vunpack.c.l.b16 %v92
    %v132 = vunpack.c.l.b16 %v93
    %v133 = vunpack.c.l.b16 %v94
    %v134 = vunpack.c.l.b16 %v95
    %v135 = vunpack.c.l.b16 %v96
    %v136 = vunpack.c.l.b16 %v97
    %v137 = vunpack.c.l.b16 %v98
    %v138 = vunpack.c.l.b16 %v99
    %v139 = vunpack.c.l.b16 %v100
    %v140 = vunpack.c.l.b16 %v101
    %v141 = vunpack.c.l.b16 %v102
    %v142 = vunpack.c.l.b16 %v103
    %v143 = vunpack.c.l.b16 %v104
    %v144 = vpack.c.b16 %v129, %v128
    %v145 = vpack.c.b16 %v131, %v130
    %v146 = vpack.c.b16 %v133, %v132
    %v147 = vpack.c.b16 %v135, %v134
    %v148 = vpack.c.b16 %v137, %v136
    %v149 = vpack.c.b16 %v139, %v138
    %v150 = vpack.c.b16 %v141, %v140
    %v151 = vpack.c.b16 %v143, %v142
    %160 = vmatprep.subr.bf16.mxu0 0
    %161 = vmatpush1.bf16.msra.mxu0 %v151
    %162 = vmatprep.subr.bf16.mxu0 0
    %163 = vmatpush1.bf16.msra.mxu0 %v150
    %164 = vmatprep.subr.bf16.mxu0 0
    %165 = vmatpush1.bf16.msra.mxu0 %v149
    %166 = vmatprep.subr.bf16.mxu0 0
    %167 = vmatpush1.bf16.msra.mxu0 %v148
    %168 = vmatprep.subr.bf16.mxu0 0
    %169 = vmatpush1.bf16.msra.mxu0 %v147
    %170 = vmatprep.subr.bf16.mxu0 0
    %171 = vmatpush1.bf16.msra.mxu0 %v146
    %172 = vmatprep.subr.bf16.mxu0 0
    %173 = vmatpush1.bf16.msra.mxu0 %v145
    %174 = vmatprep.subr.bf16.mxu0 0
    %175 = vmatpush1.bf16.msra.mxu0 %v144
    %176 = vmatprep.subr.bf16.mxu0 0
    %177 = vmatpush2.bf16.msra.mxu0 0
    %178 = vmatprep.subr.bf16.mxu0 0
    %179 = vmatpush2.bf16.msra.mxu0 0
    %180 = vmatprep.subr.bf16.mxu0 0
    %181 = vmatpush2.bf16.msra.mxu0 0
    %182 = vmatprep.subr.bf16.mxu0 0
    %183 = vmatpush2.bf16.msra.mxu0 0
    %184 = vmatprep.subr.bf16.mxu0 0
    %185 = vmatpush2.bf16.msra.mxu0 0
    %186 = vmatprep.subr.bf16.mxu0 0
    %187 = vmatpush2.bf16.msra.mxu0 0
    %188 = vmatprep.subr.bf16.mxu0 0
    %189 = vmatpush2.bf16.msra.mxu0 0
    %190 = vmatprep.subr.bf16.mxu0 0
    %191 = vmatpush2.bf16.msra.mxu0 0
    %192 = vmatprep.mubr.bf16.mxu0 0
    %193 = vmatmul.mubr.bf16.gmra.mxu0 %v88
    %v194 = vpop.f32.mrf.mxu0
    %v195 = vadd.f32 %v110, %v194
    %v196 = vpop.f32.mrf.mxu0
    %v197 = vpop.f32.mrf.mxu0
    %v198 = vadd.f32 %v110, %v197
    %v199 = vpop.f32.mrf.mxu0
    %200 = vdwg.mxu0
    %v201 = vadd.f32 %v44, %v195
    %v202 = vadd.f32 %v45, %v198
    %203 = vst [vmem:[#allocation7] sm:$0xff] %v201
    %204 = vst [vmem:[#allocation7 + $0x8] sm:$0xff] %v202
    // Predicated region
    $region22: #{tpu_custom_call.1} parent=1 // pred_check
      _
    $region23: #{tpu_custom_call.1} parent=1 // pred_check_branch
      %206 = sbr.rel (0) target = $region25
    $region24: #{tpu_custom_call.1} parent=1 // pred_region
      %s208 = ssub.s32 256, 256
      %209 = vsyncadd [#allocation4], %s208
      %s210 = sshll.u32 [#allocation7], 4
      %s211 = int_to_ptr.vmem [resolvable:$true] %s210
      %216 = dma.vmem_to_hbm [thread:$0]  %s211, 256, %s3, [#allocation4], 128, 128, 8
    $region25: #{tpu_custom_call.1} parent=1 // pred_fallthru
      _
    // Predicated region
    $region26: #{tpu_custom_call.1} parent=1 // pred_check
      _
    $region27: #{tpu_custom_call.1} parent=1 // pred_check_branch
      %218 = sbr.rel (0) target = $region29
    $region28: #{tpu_custom_call.1} parent=1 // pred_region
      %219 = dma.done [#allocation4], 256
    $region29: #{tpu_custom_call.1} parent=1 // pred_fallthru
      _
    %220 = vsyncpa [#allocation3], 1
    %221 = vsyncpa [#allocation6], 1
    %222 = vsyncpa [#allocation4], 1

</llo_original>
